<compile_context>
chip_gen: v7x
topology: tpu7x:2x2x1
jax: 0.10.0
libtpu: 0.0.40
codegen_flags: <defaults>
</compile_context>

<pallas_src>
import math

import numpy as np
import jax
import jax.numpy as jnp
from jax import lax
from jax.experimental import pallas as pl
from jax.experimental.pallas import tpu as pltpu


# ----------------------------- init-time helpers -----------------------------

def _dim_from_tril_len(n: int) -> int:
    return int((-1 + math.sqrt(1 + 8 * n)) / 2)


def lower_triangular_vector_to_covariance_matrix(vec, diagonal: bool):
    vec = jnp.asarray(vec, jnp.float32)
    if diagonal:
        return jnp.diag(vec)
    dim = _dim_from_tril_len(int(vec.shape[0]))
    rows, cols = np.tril_indices(dim)
    m = jnp.zeros((dim, dim), jnp.float32).at[rows, cols].set(vec)
    return m + m.T - jnp.diag(jnp.diag(m))


def _set_scale(init_vec, diagonal: bool):
    # mirrors CovarianceMatrix._set_scale (runs once at init, plain JAX)
    var_mat = lower_triangular_vector_to_covariance_matrix(init_vec, diagonal)
    m1 = jnp.linalg.cholesky(var_mat).T
    v1 = jnp.diag(m1)
    m2 = jnp.abs(10.0 * (m1 - jnp.diag(v1)) + jnp.diag(v1 / jnp.exp(jnp.float32(0.1))))
    return m2.T


# ------------------------------ Pallas kernels --------------------------------

def _aat_single_kernel(a_ref, o_ref):
    # Whole (TP,TP) maT tile resident in VMEM; one MXU pass computing A @ A^T.
    # Contract the LAST axis of both operands so no explicit transpose of the
    # tile is needed.
    a = a_ref[...]
    o_ref[...] = lax.dot_general(
        a, a,
        dimension_numbers=(((1,), (1,)), ((), ())),
        preferred_element_type=jnp.float32,
    )


def _aat_single(maT):
    TP = maT.shape[0]
    return pl.pallas_call(
        _aat_single_kernel,
        out_shape=jax.ShapeDtypeStruct((TP, TP), jnp.float32),
        # grid-less call: no pipelining, single-buffered (in + out only).
        cost_estimate=pl.CostEstimate(
            flops=2 * TP ** 3, transcendentals=0, bytes_accessed=2 * TP * TP * 4),
        compiler_params=pltpu.CompilerParams(vmem_limit_bytes=32 * 1024 * 1024),
    )(maT)


def _aat_tiled_kernel(a_ref, b_ref, o_ref, acc_ref):
    @pl.when(pl.program_id(2) == 0)
    def _():
        acc_ref[...] = jnp.zeros_like(acc_ref)

    acc_ref[...] += lax.dot_general(
        a_ref[...], b_ref[...],
        dimension_numbers=(((1,), (1,)), ((), ())),   # A[i,k] @ A[j,k]^T
        preferred_element_type=jnp.float32,
    )

    @pl.when(pl.program_id(2) == pl.num_programs(2) - 1)
    def _():
        o_ref[...] = acc_ref[...]


def _aat_tiled(maT, *, tile=512):
    # Standard tiled A @ A^T: both operand streams come from the same array,
    # contraction on the last axis of both tiles (no transpose emitted).
    TP = maT.shape[0]
    t = min(tile, TP)
    while TP % t != 0:   # TP is a multiple of 128, so t bottoms out at >= 128
        t //= 2
    tm = tn = tk = t
    return pl.pallas_call(
        _aat_tiled_kernel,
        out_shape=jax.ShapeDtypeStruct((TP, TP), jnp.float32),
        grid_spec=pltpu.PrefetchScalarGridSpec(
            num_scalar_prefetch=0,
            grid=(TP // tm, TP // tn, TP // tk),
            in_specs=[pl.BlockSpec((tm, tk), lambda i, j, k: (i, k)),
                      pl.BlockSpec((tn, tk), lambda i, j, k: (j, k))],
            out_specs=pl.BlockSpec((tm, tn), lambda i, j, k: (i, j)),
            scratch_shapes=[pltpu.VMEM((tm, tn), jnp.float32)]),
        compiler_params=pltpu.CompilerParams(
            dimension_semantics=("parallel", "parallel", "arbitrary"),
            vmem_limit_bytes=32 * 1024 * 1024),
        cost_estimate=pl.CostEstimate(
            flops=2 * TP ** 3, transcendentals=0,
            bytes_accessed=2 * (TP // t) * TP * TP * 4 + TP * TP * 4),
    )(maT, maT)


# Whole-matrix-in-VMEM path cap: 2 * TP^2 * 4B must stay well under the scoped
# VMEM limit on every generation (v5e 16 MiB default, v7x 64 MiB physical).
_SINGLE_TILE_MAX = 1024


def aat_block_diag_pallas(maT):
    if maT.shape[0] <= _SINGLE_TILE_MAX:
        return _aat_single(maT)
    return _aat_tiled(maT)


# ------------------------------ module port ----------------------------------

class CovarianceMatrix:
    def __init__(self, lower_triangular_vectors_init, diagonals):
        if len(lower_triangular_vectors_init) > 0 and isinstance(
            lower_triangular_vectors_init[0], float
        ):
            lower_triangular_vectors_init = [lower_triangular_vectors_init]
        if isinstance(diagonals, bool):
            diagonals = [diagonals] * len(lower_triangular_vectors_init)
        self.diagonals = list(diagonals)
        # nn.Parameter(tc.tensor([0.1] * length)) -> deterministic 0.1 init
        self.parameter_values = [
            jnp.full((len(v),), 0.1, jnp.float32) for v in lower_triangular_vectors_init
        ]
        self.scales = [
            _set_scale(jnp.asarray(v, jnp.float32), d)
            for v, d in zip(lower_triangular_vectors_init, self.diagonals)
        ]
        self.dims = [int(s.shape[0]) for s in self.scales]
        self.total = sum(self.dims)
        # Pad to a multiple of 128: lane-dense tiles, no masked stores.
        self.padded_total = max(128, ((self.total + 127) // 128) * 128)
        self.is_scale = True

        # Precompute, per entry of the concatenated parameter vector:
        #   - its (row, col) position in the fused block-diagonal matrix,
        #   - the corresponding scale value scale_b[row, col],
        #   - whether it is a diagonal entry.
        # forward() then does O(L) work + one scatter; no (TP,TP) mask/exp pass
        # and no symmetrization are needed (the kernel only sees maT itself).
        rows_all, cols_all, scale_all, isdiag_all = [], [], [], []
        off = 0
        for dim, diag_flag, s in zip(self.dims, self.diagonals, self.scales):
            s_np = np.asarray(s, np.float32)
            if diag_flag:
                r = np.arange(dim)
                c = np.arange(dim)
            else:
                r, c = np.tril_indices(dim)
            rows_all.append(r + off)
            cols_all.append(c + off)
            scale_all.append(s_np[r, c])
            isdiag_all.append(r == c)
            off += dim
        self._scatter_rows = jnp.asarray(np.concatenate(rows_all), jnp.int32)
        self._scatter_cols = jnp.asarray(np.concatenate(cols_all), jnp.int32)
        self._entry_scale = jnp.asarray(np.concatenate(scale_all), jnp.float32)
        self._entry_is_diag = jnp.asarray(np.concatenate(isdiag_all))

        # NOTE: a per-block batched (num_blocks, 128, 128) layout was considered
        # (review item #6) but for the typical torchpm regime (a handful of tiny
        # blocks, total << 128) the fused single tile does strictly fewer MXU
        # flops because every block would be padded up to the 128 tile floor.

    def forward(self):
        if not self.is_scale:
            # TODO(synk): descale()/scale() in-place parameter rewriting (host-side
            # optimizer bookkeeping) is not ported; only the default is_scale=True
            # forward path is implemented.
            raise NotImplementedError("only the is_scale=True path is implemented")
        TP = self.padded_total
        vals = jnp.concatenate(
            [jnp.asarray(p, jnp.float32) for p in self.parameter_values]
        )
        # O(L) scale/exp work (was a full (TP,TP) VPU/EUP pass inside the kernel).
        maT_vals = jnp.where(
            self._entry_is_diag,
            jnp.exp(vals) * self._entry_scale,
            vals * self._entry_scale,
        )
        # One scatter builds maT directly: per-block strictly-lower + diagonal
        # entries, zero everywhere else (padding and cross-block regions).
        maT = jnp.zeros((TP, TP), jnp.float32).at[
            self._scatter_rows, self._scatter_cols
        ].set(maT_vals)
        out_padded = aat_block_diag_pallas(maT)
        # block_diag(*blocks) is produced directly; just drop the zero padding.
        return out_padded[: self.total, : self.total]


# pure-JAX reference for correctness checking
def _ref_forward(module: CovarianceMatrix):
    blocks = []
    for p, s, diag in zip(module.parameter_values, module.scales, module.diagonals):
        mat = lower_triangular_vector_to_covariance_matrix(p, diag)
        x = mat * s
        diag_part = jnp.exp(jnp.diag(mat)) * jnp.diag(s)
        maT = jnp.tril(x) - jnp.diag(jnp.diag(x)) + jnp.diag(diag_part)
        blocks.append(maT @ maT.T)
    return jax.scipy.linalg.block_diag(*blocks)


if __name__ == "__main__":
    key = jax.random.PRNGKey(0)
    k1, k2 = jax.random.split(key)

    # block 0: full (non-diagonal) 3x3 covariance -> lower-triangular vector (len 6)
    A = jax.random.normal(k1, (3, 3), jnp.float32)
    cov0 = np.asarray(A @ A.T + 0.5 * jnp.eye(3, dtype=jnp.float32))
    rows, cols = np.tril_indices(3)
    ltv0 = [float(v) for v in cov0[rows, cols]]

    # block 1: diagonal 4x4 covariance -> variance vector (len 4)
    ltv1 = [float(v) for v in (np.abs(np.asarray(jax.random.normal(k2, (4,)))) + 0.1)]

    module = CovarianceMatrix([ltv0, ltv1], diagonals=[False, True])
    out = jax.block_until_ready(module.forward())

    ref = _ref_forward(module)
    assert out.shape == (7, 7), out.shape
    assert out.dtype == jnp.float32
    assert jnp.allclose(out, ref, atol=1e-5, rtol=1e-5), (out, ref)

    # Also exercise the tiled-grid path (used when TP > _SINGLE_TILE_MAX) at a
    # small size so both kernels compile and run in this script.
    a = jax.random.normal(jax.random.PRNGKey(1), (256, 256), jnp.float32)
    got = jax.block_until_ready(_aat_tiled(a, tile=128))
    want = np.asarray(a, np.float64) @ np.asarray(a, np.float64).T
    assert np.allclose(np.asarray(got, np.float64), want, atol=1e-1, rtol=1e-3)

    print("KERNEL_OK")
</pallas_src>

<mosaic_0001>
module attributes {stable_mosaic.version = 11 : i64} {
  func.func @_aat_single_kernel(%arg0: memref<128x128xf32, #tpu.memory_space<vmem>>, %arg1: memref<128x128xf32, #tpu.memory_space<vmem>>) attributes {dimension_semantics = [], scalar_prefetch = 0 : i64, scratch_operands = 0 : i64, tpu.core_type = #tpu.core_type<tc>} {
    %c0 = arith.constant 0 : index
    %c0_0 = arith.constant 0 : index
    %0 = vector.load %arg0[%c0, %c0_0] : memref<128x128xf32, #tpu.memory_space<vmem>>, vector<128x128xf32>
    %cst = arith.constant dense<0.000000e+00> : vector<128x128xf32>
    %1 = tpu.matmul %0, %0, %cst {dimension_numbers = #tpu.dot_dimension_numbers<[1], [1], [0], [0], [0, 0, 1, 0], [], []>} : vector<128x128xf32>, vector<128x128xf32>, vector<128x128xf32> -> vector<128x128xf32>
    %c0_1 = arith.constant 0 : index
    %c0_2 = arith.constant 0 : index
    %2 = vector.load %arg1[%c0_1, %c0_2] : memref<128x128xf32, #tpu.memory_space<vmem>>, vector<128x128xf32>
    tpu.vector_store %arg1[%c0_1, %c0_2], %1 {strides = array<i32>} : memref<128x128xf32, #tpu.memory_space<vmem>>, vector<128x128xf32>,
    return
  }
}

</mosaic_0001>

<llo_original>
// kernel: tpu_custom_call.1
$region0: #{tpu_custom_call.1}
  #allocation0 [shape = 'u32[]', space=smem, size = 0x4, offset = 0x4, fixed_abs, tag = 'smem constant byte address 0x4 - core index']
  #allocation1 [shape = 'u32[144,128]{1,0:T(1,128)}', space=vmem, size = 0x12000, scoped, tag = 'internal scratch']
  %s0 = inlined_call_operand.hbm [shape: f32[128,128], index: 0, kind: input, shape index: {}]
  %s1 = inlined_call_operand.hbm [shape: f32[128,128], index: 1, kind: output, shape index: {}]
  %s2 = sld [smem:[#allocation0]]
  $region18: #{tpu_custom_call.1} parent=0
    _
  %s4 = ssub.s32 1, %s2
  %s5 = scalar_select 0, %s4, %s2
  $region1: #{tpu_custom_call.1} parent=0
    #allocation2 [shape = 'u8[65536]{0}', space=vmem, size = 0x10000, scoped, tag = 'input window, operand 0, single buffered']
    #allocation3 [shape = 's32[1]{0}', space=sflag, size = 0x4, scoped, tag = 'scoped memory for tpu_custom_call.1']
    #allocation4 [shape = 's32[1]{0}', space=sflag, size = 0x4, scoped, tag = 'scoped memory for tpu_custom_call.1']
    #allocation5 [shape = 'u8[65536]{0}', space=vmem, size = 0x10000, scoped, tag = 'output window, operand 0, single buffered']
    %6 = vsyncpa [#allocation3], 0
    %7 = vsyncpa [#allocation4], 0
    // Predicated region
    $region2: #{tpu_custom_call.1} parent=1 // pred_check
      _
    $region3: #{tpu_custom_call.1} parent=1 // pred_check_branch
      %9 = sbr.rel (0) target = $region5
    $region4: #{tpu_custom_call.1} parent=1 // pred_region
      %s11 = ssub.s32 2048, 2048
      %12 = vsyncadd [#allocation3], %s11
      %s13 = sshll.u32 [#allocation2], 4
      %s14 = int_to_ptr.vmem [resolvable:$true] %s13
      %19 = dma.hbm_to_vmem [thread:$0]  %s0, 2048, %s14, [#allocation3], 128, 128, 8
    $region5: #{tpu_custom_call.1} parent=1 // pred_fallthru
      _
    // Predicated region
    $region6: #{tpu_custom_call.1} parent=1 // pred_check
      _
    $region7: #{tpu_custom_call.1} parent=1 // pred_check_branch
      %21 = sbr.rel (0) target = $region9
    $region8: #{tpu_custom_call.1} parent=1 // pred_region
      %22 = dma.done [#allocation3], 2048
    $region9: #{tpu_custom_call.1} parent=1 // pred_fallthru
      _
    %v23 = vld [vmem:[#allocation2] sm:$0xff]
    %v24 = vld [vmem:[#allocation2 + $0x8] sm:$0xff]
    %v25 = vld [vmem:[#allocation2 + $0x10] sm:$0xff]
    %v26 = vld [vmem:[#allocation2 + $0x18] sm:$0xff]
    %v27 = vld [vmem:[#allocation2 + $0x20] sm:$0xff]
    %v28 = vld [vmem:[#allocation2 + $0x28] sm:$0xff]
    %v29 = vld [vmem:[#allocation2 + $0x30] sm:$0xff]
    %v30 = vld [vmem:[#allocation2 + $0x38] sm:$0xff]
    %v31 = vld [vmem:[#allocation2 + $0x40] sm:$0xff]
    %v32 = vld [vmem:[#allocation2 + $0x48] sm:$0xff]
    %v33 = vld [vmem:[#allocation2 + $0x50] sm:$0xff]
    %v34 = vld [vmem:[#allocation2 + $0x58] sm:$0xff]
    %v35 = vld [vmem:[#allocation2 + $0x60] sm:$0xff]
    %v36 = vld [vmem:[#allocation2 + $0x68] sm:$0xff]
    %v37 = vld [vmem:[#allocation2 + $0x70] sm:$0xff]
    %v38 = vld [vmem:[#allocation2 + $0x78] sm:$0xff]
    %39 = vmatprep.subr.mxu0 0.0
    %40 = vmatpush1.xpose.msra.mxu0 %v23
    %41 = vmatprep.subr.mxu0 0.0
    %42 = vmatpush1.xpose.msra.mxu0 %v24
    %43 = vmatprep.subr.mxu0 0.0
    %44 = vmatpush1.xpose.msra.mxu0 %v25
    %45 = vmatprep.subr.mxu0 0.0
    %46 = vmatpush1.xpose.msra.mxu0 %v26
    %47 = vmatprep.subr.mxu0 0.0
    %48 = vmatpush1.xpose.msra.mxu0 %v27
    %49 = vmatprep.subr.mxu0 0.0
    %50 = vmatpush1.xpose.msra.mxu0 %v28
    %51 = vmatprep.subr.mxu0 0.0
    %52 = vmatpush1.xpose.msra.mxu0 %v29
    %53 = vmatprep.subr.mxu0 0.0
    %54 = vmatpush1.xpose.msra.mxu0 %v30
    %55 = vmatprep.subr.mxu0 0.0
    %56 = vmatpush1.xpose.msra.mxu0 %v31
    %57 = vmatprep.subr.mxu0 0.0
    %58 = vmatpush1.xpose.msra.mxu0 %v32
    %59 = vmatprep.subr.mxu0 0.0
    %60 = vmatpush1.xpose.msra.mxu0 %v33
    %61 = vmatprep.subr.mxu0 0.0
    %62 = vmatpush1.xpose.msra.mxu0 %v34
    %63 = vmatprep.subr.mxu0 0.0
    %64 = vmatpush1.xpose.msra.mxu0 %v35
    %65 = vmatprep.subr.mxu0 0.0
    %66 = vmatpush1.xpose.msra.mxu0 %v36
    %67 = vmatprep.subr.mxu0 0.0
    %68 = vmatpush1.xpose.msra.mxu0 %v37
    %69 = vmatprep.subr.mxu0 0.0
    %70 = vmatpush1.xpose.msra.mxu0 %v38
    %71 = vmatprep.subr.mxu0 0.0
    %72 = vmatpush1.xpose.msra.mxu0 0.0
    %73 = vmatprep.subr.mxu0 0.0
    %74 = vmatpush1.xpose.msra.mxu0 0.0
    %75 = vmatprep.subr.mxu0 0.0
    %76 = vmatpush1.xpose.msra.mxu0 0.0
    %77 = vmatprep.subr.mxu0 0.0
    %78 = vmatpush1.xpose.msra.mxu0 0.0
    %79 = vmatprep.subr.mxu0 0.0
    %80 = vmatpush1.xpose.msra.mxu0 0.0
    %81 = vmatprep.subr.mxu0 0.0
    %82 = vmatpush1.xpose.msra.mxu0 0.0
    %83 = vmatprep.subr.mxu0 0.0
    %84 = vmatpush1.xpose.msra.mxu0 0.0
    %85 = vmatprep.subr.mxu0 0.0
    %86 = vmatpush1.xpose.msra.mxu0 0.0
    %87 = vmatprep.subr.mxu0 0.0
    %88 = vmatpush1.xpose.msra.mxu0 0.0
    %89 = vmatprep.subr.mxu0 0.0
    %90 = vmatpush1.xpose.msra.mxu0 0.0
    %91 = vmatprep.subr.mxu0 0.0
    %92 = vmatpush1.xpose.msra.mxu0 0.0
    %93 = vmatprep.subr.mxu0 0.0
    %94 = vmatpush1.xpose.msra.mxu0 0.0
    %95 = vmatprep.subr.mxu0 0.0
    %96 = vmatpush1.xpose.msra.mxu0 0.0
    %97 = vmatprep.subr.mxu0 0.0
    %98 = vmatpush1.xpose.msra.mxu0 0.0
    %99 = vmatprep.subr.mxu0 0.0
    %100 = vmatpush1.xpose.msra.mxu0 0.0
    %101 = vmatprep.subr.mxu0 0.0
    %102 = vmatpush1.xpose.msra.mxu0 0.0
    %103 = vmatprep.mubr.f32.mxu0 0.0
    %104 = vmatmul.mubr.f32.gmra.mrb[0].mxu0 %v23
    %v105 = vpop.f32.mrb[0].mxu0
    %v106 = vadd.f32 0.0, %v105
    %v107 = vpop.f32.mrb[0].mxu0
    %108 = vmatprep.mubr.f32.mxu0 0.0
    %109 = vmatmul.mubr.f32.gmra.mrb[0].mxu0 %v24
    %v110 = vpop.f32.mrb[0].mxu0
    %v111 = vadd.f32 0.0, %v110
    %v112 = vpop.f32.mrb[0].mxu0
    %113 = vmatprep.mubr.f32.mxu0 0.0
    %114 = vmatmul.mubr.f32.gmra.mrb[0].mxu0 %v25
    %v115 = vpop.f32.mrb[0].mxu0
    %v116 = vadd.f32 0.0, %v115
    %v117 = vpop.f32.mrb[0].mxu0
    %118 = vmatprep.mubr.f32.mxu0 0.0
    %119 = vmatmul.mubr.f32.gmra.mrb[0].mxu0 %v26
    %v120 = vpop.f32.mrb[0].mxu0
    %v121 = vadd.f32 0.0, %v120
    %v122 = vpop.f32.mrb[0].mxu0
    %123 = vmatprep.mubr.f32.mxu0 0.0
    %124 = vmatmul.mubr.f32.gmra.mrb[0].mxu0 %v27
    %v125 = vpop.f32.mrb[0].mxu0
    %v126 = vadd.f32 0.0, %v125
    %v127 = vpop.f32.mrb[0].mxu0
    %128 = vmatprep.mubr.f32.mxu0 0.0
    %129 = vmatmul.mubr.f32.gmra.mrb[0].mxu0 %v28
    %v130 = vpop.f32.mrb[0].mxu0
    %v131 = vadd.f32 0.0, %v130
    %v132 = vpop.f32.mrb[0].mxu0
    %133 = vmatprep.mubr.f32.mxu0 0.0
    %134 = vmatmul.mubr.f32.gmra.mrb[0].mxu0 %v29
    %v135 = vpop.f32.mrb[0].mxu0
    %v136 = vadd.f32 0.0, %v135
    %v137 = vpop.f32.mrb[0].mxu0
    %138 = vmatprep.mubr.f32.mxu0 0.0
    %139 = vmatmul.mubr.f32.gmra.mrb[0].mxu0 %v30
    %v140 = vpop.f32.mrb[0].mxu0
    %v141 = vadd.f32 0.0, %v140
    %v142 = vpop.f32.mrb[0].mxu0
    %143 = vmatprep.mubr.f32.mxu0 0.0
    %144 = vmatmul.mubr.f32.gmra.mrb[0].mxu0 %v31
    %v145 = vpop.f32.mrb[0].mxu0
    %v146 = vadd.f32 0.0, %v145
    %v147 = vpop.f32.mrb[0].mxu0
    %148 = vmatprep.mubr.f32.mxu0 0.0
    %149 = vmatmul.mubr.f32.gmra.mrb[0].mxu0 %v32
    %v150 = vpop.f32.mrb[0].mxu0
    %v151 = vadd.f32 0.0, %v150
    %v152 = vpop.f32.mrb[0].mxu0
    %153 = vmatprep.mubr.f32.mxu0 0.0
    %154 = vmatmul.mubr.f32.gmra.mrb[0].mxu0 %v33
    %v155 = vpop.f32.mrb[0].mxu0
    %v156 = vadd.f32 0.0, %v155
    %v157 = vpop.f32.mrb[0].mxu0
    %158 = vmatprep.mubr.f32.mxu0 0.0
    %159 = vmatmul.mubr.f32.gmra.mrb[0].mxu0 %v34
    %v160 = vpop.f32.mrb[0].mxu0
    %v161 = vadd.f32 0.0, %v160
    %v162 = vpop.f32.mrb[0].mxu0
    %163 = vmatprep.mubr.f32.mxu0 0.0
    %164 = vmatmul.mubr.f32.gmra.mrb[0].mxu0 %v35
    %v165 = vpop.f32.mrb[0].mxu0
    %v166 = vadd.f32 0.0, %v165
    %v167 = vpop.f32.mrb[0].mxu0
    %168 = vmatprep.mubr.f32.mxu0 0.0
    %169 = vmatmul.mubr.f32.gmra.mrb[0].mxu0 %v36
    %v170 = vpop.f32.mrb[0].mxu0
    %v171 = vadd.f32 0.0, %v170
    %v172 = vpop.f32.mrb[0].mxu0
    %173 = vmatprep.mubr.f32.mxu0 0.0
    %174 = vmatmul.mubr.f32.gmra.mrb[0].mxu0 %v37
    %v175 = vpop.f32.mrb[0].mxu0
    %v176 = vadd.f32 0.0, %v175
    %v177 = vpop.f32.mrb[0].mxu0
    %178 = vmatprep.mubr.f32.mxu0 0.0
    %179 = vmatmul.mubr.f32.gmra.mrb[0].mxu0 %v38
    %v180 = vpop.f32.mrb[0].mxu0
    %v181 = vadd.f32 0.0, %v180
    %v182 = vpop.f32.mrb[0].mxu0
    %183 = vdwg.mxu0
    %184 = vst [vmem:[#allocation5] sm:$0xff] %v106
    %185 = vst [vmem:[#allocation5 + $0x8] sm:$0xff] %v111
    %186 = vst [vmem:[#allocation5 + $0x10] sm:$0xff] %v116
    %187 = vst [vmem:[#allocation5 + $0x18] sm:$0xff] %v121
    %188 = vst [vmem:[#allocation5 + $0x20] sm:$0xff] %v126
    %189 = vst [vmem:[#allocation5 + $0x28] sm:$0xff] %v131
    %190 = vst [vmem:[#allocation5 + $0x30] sm:$0xff] %v136
    %191 = vst [vmem:[#allocation5 + $0x38] sm:$0xff] %v141
    %192 = vst [vmem:[#allocation5 + $0x40] sm:$0xff] %v146
    %193 = vst [vmem:[#allocation5 + $0x48] sm:$0xff] %v151
    %194 = vst [vmem:[#allocation5 + $0x50] sm:$0xff] %v156
    %195 = vst [vmem:[#allocation5 + $0x58] sm:$0xff] %v161
    %196 = vst [vmem:[#allocation5 + $0x60] sm:$0xff] %v166
    %197 = vst [vmem:[#allocation5 + $0x68] sm:$0xff] %v171
    %198 = vst [vmem:[#allocation5 + $0x70] sm:$0xff] %v176
    %199 = vst [vmem:[#allocation5 + $0x78] sm:$0xff] %v181
    // Predicated region
    $region10: #{tpu_custom_call.1} parent=1 // pred_check
      _
    $region11: #{tpu_custom_call.1} parent=1 // pred_check_branch
      %201 = sbr.rel (0) target = $region13
    $region12: #{tpu_custom_call.1} parent=1 // pred_region
      %s203 = ssub.s32 2048, 2048
      %204 = vsyncadd [#allocation4], %s203
      %s205 = sshll.u32 [#allocation5], 4
      %s206 = int_to_ptr.vmem [resolvable:$true] %s205
      %211 = dma.vmem_to_hbm [thread:$0]  %s206, 2048, %s1, [#allocation4], 128, 128, 8
    $region13: #{tpu_custom_call.1} parent=1 // pred_fallthru
      _
    // Predicated region
    $region14: #{tpu_custom_call.1} parent=1 // pred_check
      _
    $region15: #{tpu_custom_call.1} parent=1 // pred_check_branch
      %213 = sbr.rel (0) target = $region17
    $region16: #{tpu_custom_call.1} parent=1 // pred_region
      %214 = dma.done [#allocation4], 2048
    $region17: #{tpu_custom_call.1} parent=1 // pred_fallthru
      _
    %215 = vsyncpa [#allocation3], 1
    %216 = vsyncpa [#allocation4], 1

</llo_original>
